<compile_context>
chip_gen: v6e
topology: v6e:2x2x1
jax: 0.10.0
libtpu: 0.0.40
codegen_flags: <defaults>
</compile_context>

<pallas_src>
import functools

import jax
import jax.numpy as jnp
from jax import lax
from jax.experimental import pallas as pl
from jax.experimental.pallas import tpu as pltpu


def _round_up(n, m):
    return ((n + m - 1) // m) * m


def actor_critic_kernel(x_ref, w1_ref, b1_ref, w2_ref, b2_ref,
                        wh_ref, bh_ref, out_ref, *, action_dim):
    x = x_ref[...]                                           # [tb, state_dim] f32

    # fc1 + ReLU (f32 MXU accumulation)
    h1 = jnp.dot(x, w1_ref[...], preferred_element_type=jnp.float32) + b1_ref[...]
    h1 = jnp.maximum(h1, 0.0)

    # fc2 + ReLU
    h2 = jnp.dot(h1, w2_ref[...], preferred_element_type=jnp.float32) + b2_ref[...]
    h2 = jnp.maximum(h2, 0.0)

    # fused heads, lane-padded to 128 columns:
    #   cols [0, action_dim)      -> action logits
    #   col  action_dim           -> value
    #   cols (action_dim, 128)    -> zero padding
    head = jnp.dot(h2, wh_ref[...], preferred_element_type=jnp.float32) + bh_ref[...]

    # masked, numerically-stable softmax over the logit columns only (pure VPU lane
    # mask, no lane slicing/concat); value + padding columns pass through untouched.
    col = lax.broadcasted_iota(jnp.int32, head.shape, dimension=1)
    is_logit = col < action_dim
    logits = jnp.where(is_logit, head, -jnp.inf)
    m = jnp.max(logits, axis=-1, keepdims=True)
    e = jnp.exp(logits - m)                                  # exp(-inf) == 0 off the logits
    denom = jnp.sum(e, axis=-1, keepdims=True)
    probs = e / denom                                        # exact divide: [tb,1], negligible cost

    out_ref[...] = jnp.where(is_logit, probs, head)          # single lane-dense store


def prepare_params(params, *, lane=128):
    """One-time fusion of the actor/value heads into a lane-dense [hidden, 128] matmul."""
    action_dim = params["wa"].shape[1]
    out_dim = action_dim + 1
    out_pad = max(lane, _round_up(out_dim, lane))

    wh = jnp.concatenate([params["wa"], params["wv"]], axis=1).astype(jnp.float32)
    bh = jnp.concatenate([params["ba"], params["bv"]], axis=1).astype(jnp.float32)
    wh = jnp.pad(wh, ((0, 0), (0, out_pad - out_dim)))
    bh = jnp.pad(bh, ((0, 0), (0, out_pad - out_dim)))

    prepared = {
        "w1": params["w1"].astype(jnp.float32),
        "b1": params["b1"].astype(jnp.float32),
        "w2": params["w2"].astype(jnp.float32),
        "b2": params["b2"].astype(jnp.float32),
        "wh": wh,
        "bh": bh,
    }
    return prepared, action_dim


@functools.partial(jax.jit, static_argnames=("action_dim", "block_b"))
def actor_critic_forward(x, prepared, *, action_dim, block_b=2048):
    """x: [B, state_dim] float32.  prepared: output of prepare_params()."""
    x = x.astype(jnp.float32)
    B, state_dim = x.shape
    hidden = prepared["w1"].shape[1]
    out_pad = prepared["wh"].shape[1]          # 128 (lane-dense fused head width)
    out_dim = action_dim + 1

    # Batch tiling: pad rows to a multiple of 8 sublanes; cap the tile at 4096 rows so
    # the per-step footprint (~16-20 MB at tb=4096) stays under the 32 MiB scoped-VMEM
    # default on all generations (and leaves headroom under v7x's 64 MiB physical VMEM).
    block_b = min(max(8, _round_up(block_b, 8)), 4096)
    b_pad8 = _round_up(B, 8)
    if b_pad8 >= 16:
        # Guarantee >= 2 grid steps so the "parallel" batch axis can be sharded across
        # both TensorCores on v7x (no effect on single-TC v5e/v6e).
        tb = min(block_b, _round_up((b_pad8 + 1) // 2, 8))
    else:
        tb = b_pad8
    b_pad = _round_up(B, tb)
    if b_pad != B:
        x = jnp.pad(x, ((0, b_pad - B), (0, 0)))
    grid = (b_pad // tb,)

    flops = 2 * b_pad * (state_dim * hidden + hidden * hidden + hidden * out_pad)
    bytes_accessed = (
        4 * b_pad * (state_dim + out_pad)
        + 4 * (prepared["w1"].size + prepared["w2"].size + prepared["wh"].size
               + prepared["b1"].size + prepared["b2"].size + prepared["bh"].size)
    )
    cost = pl.CostEstimate(flops=flops,
                           transcendentals=b_pad * out_dim,
                           bytes_accessed=bytes_accessed)

    out = pl.pallas_call(
        functools.partial(actor_critic_kernel, action_dim=action_dim),
        out_shape=jax.ShapeDtypeStruct((b_pad, out_pad), jnp.float32),
        grid=grid,
        in_specs=[
            pl.BlockSpec((tb, state_dim), lambda i: (i, 0)),      # x: tiled over batch
            pl.BlockSpec((state_dim, hidden), lambda i: (0, 0)),  # w1: VMEM-resident
            pl.BlockSpec((1, hidden), lambda i: (0, 0)),          # b1
            pl.BlockSpec((hidden, hidden), lambda i: (0, 0)),     # w2
            pl.BlockSpec((1, hidden), lambda i: (0, 0)),          # b2
            pl.BlockSpec((hidden, out_pad), lambda i: (0, 0)),    # fused head weights (lane-padded)
            pl.BlockSpec((1, out_pad), lambda i: (0, 0)),         # fused head bias
        ],
        out_specs=pl.BlockSpec((tb, out_pad), lambda i: (i, 0)),  # lane-dense probs||value||pad
        compiler_params=pltpu.CompilerParams(
            dimension_semantics=("parallel",)),                   # batch axis -> both TCs on v7x
        cost_estimate=cost,
    )(x, prepared["w1"], prepared["b1"], prepared["w2"], prepared["b2"],
      prepared["wh"], prepared["bh"])

    probs = out[:B, :action_dim]
    value = out[:B, action_dim:out_dim]
    return probs, value


def init_params(key, state_dim, action_dim, hidden=256):
    # Deterministic synthetic init (uniform, roughly like PyTorch's default scale).
    ks = jax.random.split(key, 8)

    def lin(kw, kb, fan_in, fan_out):
        bound = 1.0 / jnp.sqrt(fan_in)
        w = jax.random.uniform(kw, (fan_in, fan_out), jnp.float32, -bound, bound)
        b = jax.random.uniform(kb, (1, fan_out), jnp.float32, -bound, bound)
        return w, b

    w1, b1 = lin(ks[0], ks[1], state_dim, hidden)
    w2, b2 = lin(ks[2], ks[3], hidden, hidden)
    wa, ba = lin(ks[4], ks[5], hidden, action_dim)
    wv, bv = lin(ks[6], ks[7], hidden, 1)
    return {"w1": w1, "b1": b1, "w2": w2, "b2": b2,
            "wa": wa, "ba": ba, "wv": wv, "bv": bv}


if __name__ == "__main__":
    key = jax.random.PRNGKey(0)
    k_x, k_p = jax.random.split(key)

    batch, state_dim, action_dim = 2, 8, 4
    x = jax.random.normal(k_x, (batch, state_dim), jnp.float32)
    params = init_params(k_p, state_dim, action_dim)

    prepared, adim = prepare_params(params)          # head fusion/padding hoisted out of the call path
    probs, value = actor_critic_forward(x, prepared, action_dim=adim)
    jax.block_until_ready((probs, value))

    # Reference check in plain JAX.
    h1 = jnp.maximum(x @ params["w1"] + params["b1"], 0.0)
    h2 = jnp.maximum(h1 @ params["w2"] + params["b2"], 0.0)
    ref_probs = jax.nn.softmax(h2 @ params["wa"] + params["ba"], axis=1)
    ref_value = h2 @ params["wv"] + params["bv"]

    assert probs.shape == (batch, action_dim) and value.shape == (batch, 1)
    assert jnp.allclose(probs, ref_probs, atol=1e-4, rtol=1e-4)
    assert jnp.allclose(value, ref_value, atol=1e-4, rtol=1e-4)
    assert jnp.allclose(jnp.sum(probs, axis=1), 1.0, atol=1e-4)

    print("KERNEL_OK")
</pallas_src>

<mosaic_0001>
module attributes {stable_mosaic.version = 11 : i64} {
  func.func @actor_critic_kernel(%arg0: i32, %arg1: memref<8x8xf32, #tpu.memory_space<vmem>>, %arg2: memref<8x256xf32, #tpu.memory_space<vmem>>, %arg3: memref<1x256xf32, #tpu.memory_space<vmem>>, %arg4: memref<256x256xf32, #tpu.memory_space<vmem>>, %arg5: memref<1x256xf32, #tpu.memory_space<vmem>>, %arg6: memref<256x128xf32, #tpu.memory_space<vmem>>, %arg7: memref<1x128xf32, #tpu.memory_space<vmem>>, %arg8: memref<8x128xf32, #tpu.memory_space<vmem>>) attributes {dimension_semantics = [#tpu.dimension_semantics<parallel>], iteration_bounds = array<i64: 1>, scalar_prefetch = 0 : i64, scratch_operands = 0 : i64, tpu.core_type = #tpu.core_type<tc>, window_params = [{transform_indices = @transform_0, window_bounds = array<i64: 8, 8>}, {pipeline_mode = #tpu.pipeline_mode<synchronous>, transform_indices = @transform_1, window_bounds = array<i64: 8, 256>}, {pipeline_mode = #tpu.pipeline_mode<synchronous>, transform_indices = @transform_2, window_bounds = array<i64: 1, 256>}, {pipeline_mode = #tpu.pipeline_mode<synchronous>, transform_indices = @transform_3, window_bounds = array<i64: 256, 256>}, {pipeline_mode = #tpu.pipeline_mode<synchronous>, transform_indices = @transform_4, window_bounds = array<i64: 1, 256>}, {pipeline_mode = #tpu.pipeline_mode<synchronous>, transform_indices = @transform_5, window_bounds = array<i64: 256, 128>}, {pipeline_mode = #tpu.pipeline_mode<synchronous>, transform_indices = @transform_6, window_bounds = array<i64: 1, 128>}, {transform_indices = @transform_7, window_bounds = array<i64: 8, 128>}]} {
    %c0 = arith.constant 0 : index
    %c0_0 = arith.constant 0 : index
    %0 = vector.load %arg1[%c0, %c0_0] : memref<8x8xf32, #tpu.memory_space<vmem>>, vector<8x8xf32>
    %c0_1 = arith.constant 0 : index
    %c0_2 = arith.constant 0 : index
    %1 = vector.load %arg2[%c0_1, %c0_2] : memref<8x256xf32, #tpu.memory_space<vmem>>, vector<8x256xf32>
    %cst = arith.constant dense<0.000000e+00> : vector<8x256xf32>
    %2 = tpu.matmul %0, %1, %cst {dimension_numbers = #tpu.dot_dimension_numbers<[1], [0], [0], [1], [0, 0, 1, 1], [], []>} : vector<8x8xf32>, vector<8x256xf32>, vector<8x256xf32> -> vector<8x256xf32>
    %c0_3 = arith.constant 0 : index
    %c0_4 = arith.constant 0 : index
    %3 = vector.load %arg3[%c0_3, %c0_4] : memref<1x256xf32, #tpu.memory_space<vmem>>, vector<1x256xf32>
    %4 = vector.broadcast %3 : vector<1x256xf32> to vector<8x256xf32>
    %5 = arith.addf %2, %4 : vector<8x256xf32>
    %cst_5 = arith.constant 0.000000e+00 : f32
    %6 = vector.broadcast %cst_5 : f32 to vector<8x256xf32>
    %7 = arith.maximumf %5, %6 : vector<8x256xf32>
    %c0_6 = arith.constant 0 : index
    %c0_7 = arith.constant 0 : index
    %8 = vector.load %arg4[%c0_6, %c0_7] : memref<256x256xf32, #tpu.memory_space<vmem>>, vector<256x256xf32>
    %cst_8 = arith.constant dense<0.000000e+00> : vector<8x256xf32>
    %9 = tpu.matmul %7, %8, %cst_8 {dimension_numbers = #tpu.dot_dimension_numbers<[1], [0], [0], [1], [0, 0, 1, 1], [], []>} : vector<8x256xf32>, vector<256x256xf32>, vector<8x256xf32> -> vector<8x256xf32>
    %c0_9 = arith.constant 0 : index
    %c0_10 = arith.constant 0 : index
    %10 = vector.load %arg5[%c0_9, %c0_10] : memref<1x256xf32, #tpu.memory_space<vmem>>, vector<1x256xf32>
    %11 = vector.broadcast %10 : vector<1x256xf32> to vector<8x256xf32>
    %12 = arith.addf %9, %11 : vector<8x256xf32>
    %cst_11 = arith.constant 0.000000e+00 : f32
    %13 = vector.broadcast %cst_11 : f32 to vector<8x256xf32>
    %14 = arith.maximumf %12, %13 : vector<8x256xf32>
    %c0_12 = arith.constant 0 : index
    %c0_13 = arith.constant 0 : index
    %15 = vector.load %arg6[%c0_12, %c0_13] : memref<256x128xf32, #tpu.memory_space<vmem>>, vector<256x128xf32>
    %cst_14 = arith.constant dense<0.000000e+00> : vector<8x128xf32>
    %16 = tpu.matmul %14, %15, %cst_14 {dimension_numbers = #tpu.dot_dimension_numbers<[1], [0], [0], [1], [0, 0, 1, 1], [], []>} : vector<8x256xf32>, vector<256x128xf32>, vector<8x128xf32> -> vector<8x128xf32>
    %c0_15 = arith.constant 0 : index
    %c0_16 = arith.constant 0 : index
    %17 = vector.load %arg7[%c0_15, %c0_16] : memref<1x128xf32, #tpu.memory_space<vmem>>, vector<1x128xf32>
    %18 = vector.broadcast %17 : vector<1x128xf32> to vector<8x128xf32>
    %19 = arith.addf %16, %18 : vector<8x128xf32>
    %20 = tpu.iota {dimensions = array<i32: 1>} : vector<8x128xi32>
    %c4_i32 = arith.constant 4 : i32
    %21 = vector.broadcast %c4_i32 : i32 to vector<8x128xi32>
    %22 = arith.cmpi slt, %20, %21 : vector<8x128xi32>
    %cst_17 = arith.constant 0xFF800000 : f32
    %23 = vector.broadcast %cst_17 : f32 to vector<8x128xf32>
    %24 = arith.select %22, %19, %23 : vector<8x128xi1>, vector<8x128xf32>
    %cst_18 = arith.constant dense<0xFF800000> : vector<8xf32>
    %25 = vector.multi_reduction <maximumf>, %24, %cst_18 [1] : vector<8x128xf32> to vector<8xf32>
    %26 = vector.shape_cast %25 : vector<8xf32> to vector<8x1xf32>
    %27 = vector.broadcast %26 : vector<8x1xf32> to vector<8x128xf32>
    %28 = arith.subf %24, %27 : vector<8x128xf32>
    %29 = math.exp %28 : vector<8x128xf32>
    %cst_19 = arith.constant dense<0.000000e+00> : vector<8xf32>
    %30 = vector.multi_reduction <add>, %29, %cst_19 [1] : vector<8x128xf32> to vector<8xf32>
    %31 = vector.shape_cast %30 : vector<8xf32> to vector<8x1xf32>
    %32 = vector.broadcast %31 : vector<8x1xf32> to vector<8x128xf32>
    %33 = arith.divf %29, %32 : vector<8x128xf32>
    %34 = arith.select %22, %33, %19 : vector<8x128xi1>, vector<8x128xf32>
    %c0_20 = arith.constant 0 : index
    %c0_21 = arith.constant 0 : index
    %35 = vector.load %arg8[%c0_20, %c0_21] : memref<8x128xf32, #tpu.memory_space<vmem>>, vector<8x128xf32>
    tpu.vector_store %arg8[%c0_20, %c0_21], %34 {strides = array<i32>} : memref<8x128xf32, #tpu.memory_space<vmem>>, vector<8x128xf32>,
    return
  }
  func.func @transform_0(%arg0: i32) -> (i32, i32) {
    %c0_i32 = arith.constant 0 : i32
    %c0_i32_0 = arith.constant 0 : i32
    return %arg0, %c0_i32 : i32, i32
  }
  func.func @transform_1(%arg0: i32) -> (i32, i32) {
    %c0_i32 = arith.constant 0 : i32
    %c0_i32_0 = arith.constant 0 : i32
    %c0_i32_1 = arith.constant 0 : i32
    return %c0_i32, %c0_i32_0 : i32, i32
  }
  func.func @transform_2(%arg0: i32) -> (i32, i32) {
    %c0_i32 = arith.constant 0 : i32
    %c0_i32_0 = arith.constant 0 : i32
    %c0_i32_1 = arith.constant 0 : i32
    return %c0_i32, %c0_i32_0 : i32, i32
  }
  func.func @transform_3(%arg0: i32) -> (i32, i32) {
    %c0_i32 = arith.constant 0 : i32
    %c0_i32_0 = arith.constant 0 : i32
    %c0_i32_1 = arith.constant 0 : i32
    return %c0_i32, %c0_i32_0 : i32, i32
  }
  func.func @transform_4(%arg0: i32) -> (i32, i32) {
    %c0_i32 = arith.constant 0 : i32
    %c0_i32_0 = arith.constant 0 : i32
    %c0_i32_1 = arith.constant 0 : i32
    return %c0_i32, %c0_i32_0 : i32, i32
  }
  func.func @transform_5(%arg0: i32) -> (i32, i32) {
    %c0_i32 = arith.constant 0 : i32
    %c0_i32_0 = arith.constant 0 : i32
    %c0_i32_1 = arith.constant 0 : i32
    return %c0_i32, %c0_i32_0 : i32, i32
  }
  func.func @transform_6(%arg0: i32) -> (i32, i32) {
    %c0_i32 = arith.constant 0 : i32
    %c0_i32_0 = arith.constant 0 : i32
    %c0_i32_1 = arith.constant 0 : i32
    return %c0_i32, %c0_i32_0 : i32, i32
  }
  func.func @transform_7(%arg0: i32) -> (i32, i32) {
    %c0_i32 = arith.constant 0 : i32
    %c0_i32_0 = arith.constant 0 : i32
    return %arg0, %c0_i32 : i32, i32
  }
}

</mosaic_0001>

<llo_original>
// kernel: actor_critic_forward.1
$region0: #{actor_critic_forward.1}
  #allocation0 [shape = 'u32[]', space=smem, size = 0x4, offset = 0x4, fixed_abs, tag = 'smem constant byte address 0x4 - core index']
  #allocation1 [shape = 'u32[144,128]{1,0:T(1,128)}', space=vmem, size = 0x12000, scoped, tag = 'internal scratch']
  %s0 = inlined_call_operand.vmem [shape: f32[8,8], index: 0, kind: input, shape index: {}]
  %s1 = inlined_call_operand.vmem [shape: f32[8,256], index: 1, kind: input, shape index: {}]
  %s2 = inlined_call_operand.vmem [shape: f32[1,256], index: 2, kind: input, shape index: {}]
  %s3 = inlined_call_operand.hbm [shape: f32[256,256], index: 3, kind: input, shape index: {}]
  %s4 = inlined_call_operand.hbm [shape: f32[1,256], index: 4, kind: input, shape index: {}]
  %s5 = inlined_call_operand.hbm [shape: f32[256,128], index: 5, kind: input, shape index: {}]
  %s6 = inlined_call_operand.hbm [shape: f32[1,128], index: 6, kind: input, shape index: {}]
  %s7 = inlined_call_operand.vmem [shape: f32[8,128], index: 7, kind: output, shape index: {}]
  %s8 = sld [smem:[#allocation0]]
  $region54: #{actor_critic_forward.1} parent=0
    _
  %s10 = ssub.s32 1, %s8
  %s11 = scalar_select 0, %s10, %s8
  $region1: #{actor_critic_forward.1} parent=0
    #allocation2 [shape = 'u8[262144]{0}', space=vmem, size = 0x40000, scoped, tag = 'input window, operand 3, single buffered']
    #allocation3 [shape = 's32[1]{0}', space=sflag, size = 0x4, scoped, tag = 'scoped memory for actor_critic_forward.1']
    #allocation4 [shape = 'u8[1024]{0}', space=vmem, size = 0x400, scoped, tag = 'input window, operand 4, single buffered']
    #allocation5 [shape = 's32[1]{0}', space=sflag, size = 0x4, scoped, tag = 'scoped memory for actor_critic_forward.1']
    #allocation6 [shape = 'u8[131072]{0}', space=vmem, size = 0x20000, scoped, tag = 'input window, operand 5, single buffered']
    #allocation7 [shape = 'u8[512]{0}', space=vmem, size = 0x400, scoped, tag = 'input window, operand 6, single buffered']
    #allocation8 [shape = 's32[1]{0}', space=sflag, size = 0x4, scoped, tag = 'scoped memory for actor_critic_forward.1']
    %12 = vsyncpa [#allocation3], 0
    %13 = vsyncpa [#allocation5], 0
    %14 = vsyncpa [#allocation8], 0
    // Predicated region
    $region2: #{actor_critic_forward.1} parent=1 // pred_check
      _
    $region3: #{actor_critic_forward.1} parent=1 // pred_check_branch
      %16 = sbr.rel (0) target = $region5
    $region4: #{actor_critic_forward.1} parent=1 // pred_region
      _
    $region5: #{actor_critic_forward.1} parent=1 // pred_fallthru
      _
    // Predicated region
    $region6: #{actor_critic_forward.1} parent=1 // pred_check
      _
    $region7: #{actor_critic_forward.1} parent=1 // pred_check_branch
      %18 = sbr.rel (0) target = $region9
    $region8: #{actor_critic_forward.1} parent=1 // pred_region
      _
    $region9: #{actor_critic_forward.1} parent=1 // pred_fallthru
      _
    // Predicated region
    $region10: #{actor_critic_forward.1} parent=1 // pred_check
      _
    $region11: #{actor_critic_forward.1} parent=1 // pred_check_branch
      %20 = sbr.rel (0) target = $region13
    $region12: #{actor_critic_forward.1} parent=1 // pred_region
      _
    $region13: #{actor_critic_forward.1} parent=1 // pred_fallthru
      _
    // Predicated region
    $region14: #{actor_critic_forward.1} parent=1 // pred_check
      _
    $region15: #{actor_critic_forward.1} parent=1 // pred_check_branch
      %22 = sbr.rel (0) target = $region17
    $region16: #{actor_critic_forward.1} parent=1 // pred_region
      %s24 = ssub.s32 8192, 8192
      %25 = vsyncadd [#allocation3], %s24
      %s26 = sshll.u32 [#allocation2], 4
      %s27 = int_to_ptr.vmem [resolvable:$true] %s26
      %32 = dma.hbm_to_vmem [thread:$0]  %s3, 8192, %s27, [#allocation3], 256, 256, 16
    $region17: #{actor_critic_forward.1} parent=1 // pred_fallthru
      _
    // Predicated region
    $region18: #{actor_critic_forward.1} parent=1 // pred_check
      _
    $region19: #{actor_critic_forward.1} parent=1 // pred_check_branch
      %34 = sbr.rel (0) target = $region21
    $region20: #{actor_critic_forward.1} parent=1 // pred_region
      %s36 = ssub.s32 32, 32
      %37 = vsyncadd [#allocation5], %s36
      %s39 = sshll.u32 [#allocation4], 4
      %s40 = int_to_ptr.vmem [resolvable:$true] %s39
      %42 = dma.hbm_to_vmem [thread:$0]  %s4, 32, %s40, [#allocation5]
    $region21: #{actor_critic_forward.1} parent=1 // pred_fallthru
      _
    // Predicated region
    $region22: #{actor_critic_forward.1} parent=1 // pred_check
      _
    $region23: #{actor_critic_forward.1} parent=1 // pred_check_branch
      %44 = sbr.rel (0) target = $region25
    $region24: #{actor_critic_forward.1} parent=1 // pred_region
      %s46 = ssub.s32 4096, 4096
      %47 = vsyncadd [#allocation5], %s46
      %s48 = sshll.u32 [#allocation6], 4
      %s49 = int_to_ptr.vmem [resolvable:$true] %s48
      %54 = dma.hbm_to_vmem [thread:$0]  %s5, 4096, %s49, [#allocation5], 128, 128, 8
    $region25: #{actor_critic_forward.1} parent=1 // pred_fallthru
      _
    // Predicated region
    $region26: #{actor_critic_forward.1} parent=1 // pred_check
      _
    $region27: #{actor_critic_forward.1} parent=1 // pred_check_branch
      %56 = sbr.rel (0) target = $region29
    $region28: #{actor_critic_forward.1} parent=1 // pred_region
      %s58 = ssub.s32 16, 16
      %59 = vsyncadd [#allocation8], %s58
      %s61 = sshll.u32 [#allocation7], 4
      %s62 = int_to_ptr.vmem [resolvable:$true] %s61
      %64 = dma.hbm_to_vmem [thread:$0]  %s6, 16, %s62, [#allocation8]
    $region29: #{actor_critic_forward.1} parent=1 // pred_fallthru
      _
    // Predicated region
    $region30: #{actor_critic_forward.1} parent=1 // pred_check
      _
    $region31: #{actor_critic_forward.1} parent=1 // pred_check_branch
      %66 = sbr.rel (0) target = $region33
    $region32: #{actor_critic_forward.1} parent=1 // pred_region
      %67 = dma.done [#allocation3], 8192
    $region33: #{actor_critic_forward.1} parent=1 // pred_fallthru
      _
    // Predicated region
    $region34: #{actor_critic_forward.1} parent=1 // pred_check
      _
    $region35: #{actor_critic_forward.1} parent=1 // pred_check_branch
      %69 = sbr.rel (0) target = $region37
    $region36: #{actor_critic_forward.1} parent=1 // pred_region
      %70 = dma.done [#allocation5], 32
    $region37: #{actor_critic_forward.1} parent=1 // pred_fallthru
      _
    // Predicated region
    $region38: #{actor_critic_forward.1} parent=1 // pred_check
      _
    $region39: #{actor_critic_forward.1} parent=1 // pred_check_branch
      %72 = sbr.rel (0) target = $region41
    $region40: #{actor_critic_forward.1} parent=1 // pred_region
      %73 = dma.done [#allocation5], 4096
    $region41: #{actor_critic_forward.1} parent=1 // pred_fallthru
      _
    // Predicated region
    $region42: #{actor_critic_forward.1} parent=1 // pred_check
      _
    $region43: #{actor_critic_forward.1} parent=1 // pred_check_branch
      %75 = sbr.rel (0) target = $region45
    $region44: #{actor_critic_forward.1} parent=1 // pred_region
      %76 = dma.done [#allocation8], 16
    $region45: #{actor_critic_forward.1} parent=1 // pred_fallthru
      _
    %v77 = vld [vmem:[%s0] sm:$0xff]
    %v78 = vld [vmem:[%s1] sm:$0xff]
    %v79 = vld [vmem:[%s1 + $0x8] sm:$0xff]
    %v80 = vld [vmem:[%s2] sm:$0x3]
    %v82 = vlaneseq
    %v83 = vshrl.u32 %v82, 7
    %v84 = vsub.s32 0, %v83
    %v85 = vrot.slane %v80, %v84
    %v86 = vlaneseq
    %v87 = vshrl.u32 %v86, 7
    %v88 = vsub.s32 1, %v87
    %v89 = vrot.slane %v80, %v88
    %vm92 = vcmask 64512
    %v94 = vsel %vm92, %v77, 0
    %96 = vmatprep.subr.mxu0 0.0
    %97 = vmatpush1.msra.mxu0 0.0
    %98 = vmatprep.subr.mxu0 0.0
    %99 = vmatpush1.msra.mxu0 0.0
    %100 = vmatprep.subr.mxu0 0.0
    %101 = vmatpush1.msra.mxu0 0.0
    %102 = vmatprep.subr.mxu0 0.0
    %103 = vmatpush1.msra.mxu0 0.0
    %104 = vmatprep.subr.mxu0 0.0
    %105 = vmatpush1.msra.mxu0 0.0
    %106 = vmatprep.subr.mxu0 0.0
    %107 = vmatpush1.msra.mxu0 0.0
    %108 = vmatprep.subr.mxu0 0.0
    %109 = vmatpush1.msra.mxu0 0.0
    %110 = vmatprep.subr.mxu0 0.0
    %111 = vmatpush1.msra.mxu0 0.0
    %112 = vmatprep.subr.mxu0 0.0
    %113 = vmatpush1.msra.mxu0 0.0
    %114 = vmatprep.subr.mxu0 0.0
    %115 = vmatpush1.msra.mxu0 0.0
    %116 = vmatprep.subr.mxu0 0.0
    %117 = vmatpush1.msra.mxu0 0.0
    %118 = vmatprep.subr.mxu0 0.0
    %119 = vmatpush1.msra.mxu0 0.0
    %120 = vmatprep.subr.mxu0 0.0
    %121 = vmatpush1.msra.mxu0 0.0
    %122 = vmatprep.subr.mxu0 0.0
    %123 = vmatpush1.msra.mxu0 0.0
    %124 = vmatprep.subr.mxu0 0.0
    %125 = vmatpush1.msra.mxu0 0.0
    %126 = vmatprep.subr.mxu0 %v79
    %127 = vmatpush1.msra.mxu0 %v78
    %128 = vmatprep.subr.mxu0 0.0
    %129 = vmatpush2.msra.mxu0 0.0
    %130 = vmatprep.subr.mxu0 0.0
    %131 = vmatpush2.msra.mxu0 0.0
    %132 = vmatprep.subr.mxu0 0.0
    %133 = vmatpush2.msra.mxu0 0.0
    %134 = vmatprep.subr.mxu0 0.0
    %135 = vmatpush2.msra.mxu0 0.0
    %136 = vmatprep.subr.mxu0 0.0
    %137 = vmatpush2.msra.mxu0 0.0
    %138 = vmatprep.subr.mxu0 0.0
    %139 = vmatpush2.msra.mxu0 0.0
    %140 = vmatprep.subr.mxu0 0.0
    %141 = vmatpush2.msra.mxu0 0.0
    %142 = vmatprep.subr.mxu0 0.0
    %143 = vmatpush2.msra.mxu0 0.0
    %144 = vmatprep.subr.mxu0 0.0
    %145 = vmatpush2.msra.mxu0 0.0
    %146 = vmatprep.subr.mxu0 0.0
    %147 = vmatpush2.msra.mxu0 0.0
    %148 = vmatprep.subr.mxu0 0.0
    %149 = vmatpush2.msra.mxu0 0.0
    %150 = vmatprep.subr.mxu0 0.0
    %151 = vmatpush2.msra.mxu0 0.0
    %152 = vmatprep.subr.mxu0 0.0
    %153 = vmatpush2.msra.mxu0 0.0
    %154 = vmatprep.subr.mxu0 0.0
    %155 = vmatpush2.msra.mxu0 0.0
    %156 = vmatprep.subr.mxu0 0.0
    %157 = vmatpush2.msra.mxu0 0.0
    %158 = vmatprep.subr.mxu0 0.0
    %159 = vmatpush2.msra.mxu0 0.0
    %160 = vmatprep.mubr.f32.mxu0 0.0
    %161 = vmatmul.mubr.f32.gmra.mxu0 %v94
    %v162 = vpop.f32.mrf.mxu0
    %v163 = vadd.f32 %v85, %v162
    %v164 = vpop.f32.mrf.mxu0
    %v165 = vadd.f32 %v89, %v164
    %166 = vdwg.mxu0
    %v167 = vmax.f32 %v163, 0.0
    %v168 = vmax.f32 %v165, 0.0
    %v169 = vld [vmem:[#allocation2] sm:$0xff]
    %v170 = vld [vmem:[#allocation2 + $0x8] sm:$0xff]
    %v171 = vld [vmem:[#allocation2 + $0x10] sm:$0xff]
    %v172 = vld [vmem:[#allocation2 + $0x18] sm:$0xff]
    %v173 = vld [vmem:[#allocation2 + $0x20] sm:$0xff]
    %v174 = vld [vmem:[#allocation2 + $0x28] sm:$0xff]
    %v175 = vld [vmem:[#allocation2 + $0x30] sm:$0xff]
    %v176 = vld [vmem:[#allocation2 + $0x38] sm:$0xff]
    %v177 = vld [vmem:[#allocation2 + $0x40] sm:$0xff]
    %v178 = vld [vmem:[#allocation2 + $0x48] sm:$0xff]
    %v179 = vld [vmem:[#allocation2 + $0x50] sm:$0xff]
    %v180 = vld [vmem:[#allocation2 + $0x58] sm:$0xff]
    %v181 = vld [vmem:[#allocation2 + $0x60] sm:$0xff]
    %v182 = vld [vmem:[#allocation2 + $0x68] sm:$0xff]
    %v183 = vld [vmem:[#allocation2 + $0x70] sm:$0xff]
    %v184 = vld [vmem:[#allocation2 + $0x78] sm:$0xff]
    %v185 = vld [vmem:[#allocation2 + $0x80] sm:$0xff]
    %v186 = vld [vmem:[#allocation2 + $0x88] sm:$0xff]
    %v187 = vld [vmem:[#allocation2 + $0x90] sm:$0xff]
    %v188 = vld [vmem:[#allocation2 + $0x98] sm:$0xff]
    %v189 = vld [vmem:[#allocation2 + $0xa0] sm:$0xff]
    %v190 = vld [vmem:[#allocation2 + $0xa8] sm:$0xff]
    %v191 = vld [vmem:[#allocation2 + $0xb0] sm:$0xff]
    %v192 = vld [vmem:[#allocation2 + $0xb8] sm:$0xff]
    %v193 = vld [vmem:[#allocation2 + $0xc0] sm:$0xff]
    %v194 = vld [vmem:[#allocation2 + $0xc8] sm:$0xff]
    %v195 = vld [vmem:[#allocation2 + $0xd0] sm:$0xff]
    %v196 = vld [vmem:[#allocation2 + $0xd8] sm:$0xff]
    %v197 = vld [vmem:[#allocation2 + $0xe0] sm:$0xff]
    %v198 = vld [vmem:[#allocation2 + $0xe8] sm:$0xff]
    %v199 = vld [vmem:[#allocation2 + $0xf0] sm:$0xff]
    %v200 = vld [vmem:[#allocation2 + $0xf8] sm:$0xff]
    %v201 = vld [vmem:[#allocation2 + $0x100] sm:$0xff]
    %v202 = vld [vmem:[#allocation2 + $0x108] sm:$0xff]
    %v203 = vld [vmem:[#allocation2 + $0x110] sm:$0xff]
    %v204 = vld [vmem:[#allocation2 + $0x118] sm:$0xff]
    %v205 = vld [vmem:[#allocation2 + $0x120] sm:$0xff]
    %v206 = vld [vmem:[#allocation2 + $0x128] sm:$0xff]
    %v207 = vld [vmem:[#allocation2 + $0x130] sm:$0xff]
    %v208 = vld [vmem:[#allocation2 + $0x138] sm:$0xff]
    %v209 = vld [vmem:[#allocation2 + $0x140] sm:$0xff]
    %v210 = vld [vmem:[#allocation2 + $0x148] sm:$0xff]
    %v211 = vld [vmem:[#allocation2 + $0x150] sm:$0xff]
    %v212 = vld [vmem:[#allocation2 + $0x158] sm:$0xff]
    %v213 = vld [vmem:[#allocation2 + $0x160] sm:$0xff]
    %v214 = vld [vmem:[#allocation2 + $0x168] sm:$0xff]
    %v215 = vld [vmem:[#allocation2 + $0x170] sm:$0xff]
    %v216 = vld [vmem:[#allocation2 + $0x178] sm:$0xff]
    %v217 = vld [vmem:[#allocation2 + $0x180] sm:$0xff]
    %v218 = vld [vmem:[#allocation2 + $0x188] sm:$0xff]
    %v219 = vld [vmem:[#allocation2 + $0x190] sm:$0xff]
    %v220 = vld [vmem:[#allocation2 + $0x198] sm:$0xff]
    %v221 = vld [vmem:[#allocation2 + $0x1a0] sm:$0xff]
    %v222 = vld [vmem:[#allocation2 + $0x1a8] sm:$0xff]
    %v223 = vld [vmem:[#allocation2 + $0x1b0] sm:$0xff]
    %v224 = vld [vmem:[#allocation2 + $0x1b8] sm:$0xff]
    %v225 = vld [vmem:[#allocation2 + $0x1c0] sm:$0xff]
    %v226 = vld [vmem:[#allocation2 + $0x1c8] sm:$0xff]
    %v227 = vld [vmem:[#allocation2 + $0x1d0] sm:$0xff]
    %v228 = vld [vmem:[#allocation2 + $0x1d8] sm:$0xff]
    %v229 = vld [vmem:[#allocation2 + $0x1e0] sm:$0xff]
    %v230 = vld [vmem:[#allocation2 + $0x1e8] sm:$0xff]
    %v231 = vld [vmem:[#allocation2 + $0x1f0] sm:$0xff]
    %v232 = vld [vmem:[#allocation2 + $0x1f8] sm:$0xff]
    %v233 = vld [vmem:[#allocation4] sm:$0x3]
    %v235 = vlaneseq
    %v236 = vshrl.u32 %v235, 7
    %v237 = vsub.s32 0, %v236
    %v238 = vrot.slane %v233, %v237
    %v239 = vlaneseq
    %v240 = vshrl.u32 %v239, 7
    %v241 = vsub.s32 1, %v240
    %v242 = vrot.slane %v233, %v241
    %245 = vmatprep.subr.mxu0 %v200
    %246 = vmatpush1.msra.mxu0 %v199
    %247 = vmatprep.subr.mxu0 %v198
    %248 = vmatpush1.msra.mxu0 %v197
    %249 = vmatprep.subr.mxu0 %v196
    %250 = vmatpush1.msra.mxu0 %v195
    %251 = vmatprep.subr.mxu0 %v194
    %252 = vmatpush1.msra.mxu0 %v193
    %253 = vmatprep.subr.mxu0 %v192
    %254 = vmatpush1.msra.mxu0 %v191
    %255 = vmatprep.subr.mxu0 %v190
    %256 = vmatpush1.msra.mxu0 %v189
    %257 = vmatprep.subr.mxu0 %v188
    %258 = vmatpush1.msra.mxu0 %v187
    %259 = vmatprep.subr.mxu0 %v186
    %260 = vmatpush1.msra.mxu0 %v185
    %261 = vmatprep.subr.mxu0 %v184
    %262 = vmatpush1.msra.mxu0 %v183
    %263 = vmatprep.subr.mxu0 %v182
    %264 = vmatpush1.msra.mxu0 %v181
    %265 = vmatprep.subr.mxu0 %v180
    %266 = vmatpush1.msra.mxu0 %v179
    %267 = vmatprep.subr.mxu0 %v178
    %268 = vmatpush1.msra.mxu0 %v177
    %269 = vmatprep.subr.mxu0 %v176
    %270 = vmatpush1.msra.mxu0 %v175
    %271 = vmatprep.subr.mxu0 %v174
    %272 = vmatpush1.msra.mxu0 %v173
    %273 = vmatprep.subr.mxu0 %v172
    %274 = vmatpush1.msra.mxu0 %v171
    %275 = vmatprep.subr.mxu0 %v170
    %276 = vmatpush1.msra.mxu0 %v169
    %277 = vmatprep.subr.mxu0 %v232
    %278 = vmatpush2.msra.mxu0 %v231
    %279 = vmatprep.subr.mxu0 %v230
    %280 = vmatpush2.msra.mxu0 %v229
    %281 = vmatprep.subr.mxu0 %v228
    %282 = vmatpush2.msra.mxu0 %v227
    %283 = vmatprep.subr.mxu0 %v226
    %284 = vmatpush2.msra.mxu0 %v225
    %285 = vmatprep.subr.mxu0 %v224
    %286 = vmatpush2.msra.mxu0 %v223
    %287 = vmatprep.subr.mxu0 %v222
    %288 = vmatpush2.msra.mxu0 %v221
    %289 = vmatprep.subr.mxu0 %v220
    %290 = vmatpush2.msra.mxu0 %v219
    %291 = vmatprep.subr.mxu0 %v218
    %292 = vmatpush2.msra.mxu0 %v217
    %293 = vmatprep.subr.mxu0 %v216
    %294 = vmatpush2.msra.mxu0 %v215
    %295 = vmatprep.subr.mxu0 %v214
    %296 = vmatpush2.msra.mxu0 %v213
    %297 = vmatprep.subr.mxu0 %v212
    %298 = vmatpush2.msra.mxu0 %v211
    %299 = vmatprep.subr.mxu0 %v210
    %300 = vmatpush2.msra.mxu0 %v209
    %301 = vmatprep.subr.mxu0 %v208
    %302 = vmatpush2.msra.mxu0 %v207
    %303 = vmatprep.subr.mxu0 %v206
    %304 = vmatpush2.msra.mxu0 %v205
    %305 = vmatprep.subr.mxu0 %v204
    %306 = vmatpush2.msra.mxu0 %v203
    %307 = vmatprep.subr.mxu0 %v202
    %308 = vmatpush2.msra.mxu0 %v201
    %309 = vmatprep.mubr.f32.mxu0 %v168
    %310 = vmatmul.mubr.f32.gmra.mxu0 %v167
    %v311 = vpop.f32.mrf.mxu0
    %v312 = vadd.f32 %v238, %v311
    %v313 = vpop.f32.mrf.mxu0
    %v314 = vadd.f32 %v242, %v313
    %315 = vdwg.mxu0
    %v316 = vmax.f32 %v312, 0.0
    %v317 = vmax.f32 %v314, 0.0
    %v318 = vld [vmem:[#allocation6] sm:$0xff]
    %v319 = vld [vmem:[#allocation6 + $0x8] sm:$0xff]
    %v320 = vld [vmem:[#allocation6 + $0x10] sm:$0xff]
    %v321 = vld [vmem:[#allocation6 + $0x18] sm:$0xff]
    %v322 = vld [vmem:[#allocation6 + $0x20] sm:$0xff]
    %v323 = vld [vmem:[#allocation6 + $0x28] sm:$0xff]
    %v324 = vld [vmem:[#allocation6 + $0x30] sm:$0xff]
    %v325 = vld [vmem:[#allocation6 + $0x38] sm:$0xff]
    %v326 = vld [vmem:[#allocation6 + $0x40] sm:$0xff]
    %v327 = vld [vmem:[#allocation6 + $0x48] sm:$0xff]
    %v328 = vld [vmem:[#allocation6 + $0x50] sm:$0xff]
    %v329 = vld [vmem:[#allocation6 + $0x58] sm:$0xff]
    %v330 = vld [vmem:[#allocation6 + $0x60] sm:$0xff]
    %v331 = vld [vmem:[#allocation6 + $0x68] sm:$0xff]
    %v332 = vld [vmem:[#allocation6 + $0x70] sm:$0xff]
    %v333 = vld [vmem:[#allocation6 + $0x78] sm:$0xff]
    %v334 = vld [vmem:[#allocation6 + $0x80] sm:$0xff]
    %v335 = vld [vmem:[#allocation6 + $0x88] sm:$0xff]
    %v336 = vld [vmem:[#allocation6 + $0x90] sm:$0xff]
    %v337 = vld [vmem:[#allocation6 + $0x98] sm:$0xff]
    %v338 = vld [vmem:[#allocation6 + $0xa0] sm:$0xff]
    %v339 = vld [vmem:[#allocation6 + $0xa8] sm:$0xff]
    %v340 = vld [vmem:[#allocation6 + $0xb0] sm:$0xff]
    %v341 = vld [vmem:[#allocation6 + $0xb8] sm:$0xff]
    %v342 = vld [vmem:[#allocation6 + $0xc0] sm:$0xff]
    %v343 = vld [vmem:[#allocation6 + $0xc8] sm:$0xff]
    %v344 = vld [vmem:[#allocation6 + $0xd0] sm:$0xff]
    %v345 = vld [vmem:[#allocation6 + $0xd8] sm:$0xff]
    %v346 = vld [vmem:[#allocation6 + $0xe0] sm:$0xff]
    %v347 = vld [vmem:[#allocation6 + $0xe8] sm:$0xff]
    %v348 = vld [vmem:[#allocation6 + $0xf0] sm:$0xff]
    %v349 = vld [vmem:[#allocation6 + $0xf8] sm:$0xff]
    %v350 = vld [vmem:[#allocation7] sm:$0x1]
    %v352 = vlaneseq
    %v353 = vshrl.u32 %v352, 7
    %v354 = vsub.s32 0, %v353
    %v355 = vrot.slane %v350, %v354
    %357 = vmatprep.subr.mxu0 0.0
    %358 = vmatpush1.msra.mxu0 %v333
    %359 = vmatprep.subr.mxu0 0.0
    %360 = vmatpush1.msra.mxu0 %v332
    %361 = vmatprep.subr.mxu0 0.0
    %362 = vmatpush1.msra.mxu0 %v331
    %363 = vmatprep.subr.mxu0 0.0
    %364 = vmatpush1.msra.mxu0 %v330
    %365 = vmatprep.subr.mxu0 0.0
    %366 = vmatpush1.msra.mxu0 %v329
    %367 = vmatprep.subr.mxu0 0.0
    %368 = vmatpush1.msra.mxu0 %v328
    %369 = vmatprep.subr.mxu0 0.0
    %370 = vmatpush1.msra.mxu0 %v327
    %371 = vmatprep.subr.mxu0 0.0
    %372 = vmatpush1.msra.mxu0 %v326
    %373 = vmatprep.subr.mxu0 0.0
    %374 = vmatpush1.msra.mxu0 %v325
    %375 = vmatprep.subr.mxu0 0.0
    %376 = vmatpush1.msra.mxu0 %v324
    %377 = vmatprep.subr.mxu0 0.0
    %378 = vmatpush1.msra.mxu0 %v323
    %379 = vmatprep.subr.mxu0 0.0
    %380 = vmatpush1.msra.mxu0 %v322
    %381 = vmatprep.subr.mxu0 0.0
    %382 = vmatpush1.msra.mxu0 %v321
    %383 = vmatprep.subr.mxu0 0.0
    %384 = vmatpush1.msra.mxu0 %v320
    %385 = vmatprep.subr.mxu0 0.0
    %386 = vmatpush1.msra.mxu0 %v319
    %387 = vmatprep.subr.mxu0 0.0
    %388 = vmatpush1.msra.mxu0 %v318
    %389 = vmatprep.subr.mxu0 0.0
    %390 = vmatpush2.msra.mxu0 %v349
    %391 = vmatprep.subr.mxu0 0.0
    %392 = vmatpush2.msra.mxu0 %v348
    %393 = vmatprep.subr.mxu0 0.0
    %394 = vmatpush2.msra.mxu0 %v347
    %395 = vmatprep.subr.mxu0 0.0
    %396 = vmatpush2.msra.mxu0 %v346
    %397 = vmatprep.subr.mxu0 0.0
    %398 = vmatpush2.msra.mxu0 %v345
    %399 = vmatprep.subr.mxu0 0.0
    %400 = vmatpush2.msra.mxu0 %v344
    %401 = vmatprep.subr.mxu0 0.0
    %402 = vmatpush2.msra.mxu0 %v343
    %403 = vmatprep.subr.mxu0 0.0
    %404 = vmatpush2.msra.mxu0 %v342
    %405 = vmatprep.subr.mxu0 0.0
    %406 = vmatpush2.msra.mxu0 %v341
    %407 = vmatprep.subr.mxu0 0.0
    %408 = vmatpush2.msra.mxu0 %v340
    %409 = vmatprep.subr.mxu0 0.0
    %410 = vmatpush2.msra.mxu0 %v339
    %411 = vmatprep.subr.mxu0 0.0
    %412 = vmatpush2.msra.mxu0 %v338
    %413 = vmatprep.subr.mxu0 0.0
    %414 = vmatpush2.msra.mxu0 %v337
    %415 = vmatprep.subr.mxu0 0.0
    %416 = vmatpush2.msra.mxu0 %v336
    %417 = vmatprep.subr.mxu0 0.0
    %418 = vmatpush2.msra.mxu0 %v335
    %419 = vmatprep.subr.mxu0 0.0
    %420 = vmatpush2.msra.mxu0 %v334
    %421 = vmatprep.mubr.f32.mxu0 %v317
    %422 = vmatmul.mubr.f32.gmra.mxu0 %v316
    %v423 = vpop.f32.mrf.mxu0
    %v424 = vadd.f32 %v355, %v423
    %v425 = vpop.f32.mrf.mxu0
    %426 = vdwg.mxu0
    %v427 = vlaneseq
    %v428 = vand.u32 %v427, 127
    %vm429 = vcmp.lt.s32.totalorder %v428, 4
    %v430 = vsel %vm429, %v424, -inf
    %431 = vmax.xlane.f32.xlu0 %v430
    %v432 = vpop.xlane.xlu0 %431
    %v433 = vsub.f32 %v430, %v432
    %v434 = vmul.f32 %v433, 1.442695
    %v435 = vpow.pop %v434
    %436 = vadd.xlane.f32.xlu0 %v435
    %v437 = vpop.xlane.xlu0 %436
    %v438 = vrcp.pop %v437
    %v439 = vmul.f32 %v435, %v438
    %v440 = vsel %vm429, %v439, %v424
    %441 = vst [vmem:[%s7] sm:$0xff] %v440
    // Predicated region
    $region46: #{actor_critic_forward.1} parent=1 // pred_check
      _
    $region47: #{actor_critic_forward.1} parent=1 // pred_check_branch
      %443 = sbr.rel (0) target = $region49
    $region48: #{actor_critic_forward.1} parent=1 // pred_region
      _
    $region49: #{actor_critic_forward.1} parent=1 // pred_fallthru
      _
    // Predicated region
    $region50: #{actor_critic_forward.1} parent=1 // pred_check
      _
    $region51: #{actor_critic_forward.1} parent=1 // pred_check_branch
      %445 = sbr.rel (0) target = $region53
    $region52: #{actor_critic_forward.1} parent=1 // pred_region
      _
    $region53: #{actor_critic_forward.1} parent=1 // pred_fallthru
      _
    %446 = vsyncpa [#allocation3], 1
    %447 = vsyncpa [#allocation5], 1
    %448 = vsyncpa [#allocation8], 1

</llo_original>
